<compile_context>
chip_gen: v7x
topology: tpu7x:2x2x1
jax: 0.10.0
libtpu: 0.0.40
codegen_flags: <defaults>
</compile_context>

<pallas_src>
import jax
import jax.numpy as jnp
from jax.experimental import pallas as pl
from jax.experimental.pallas import tpu as pltpu


_LANES = 128                 # vreg lane width (last dim)
_MAX_BLOCK_ROWS = 2048       # (2048, 128) f32 tile = 1 MiB -> 4 MiB pipelined, well under VMEM
_MIN_SINGLE_STEP_ROWS = 1024 # below this, one grid step; above, use >=2 steps (v7x megacore)


def _tan_sin_kernel(x_ref, o_ref):
    x = x_ref[...].astype(jnp.float32)
    s = jnp.sin(x)
    c = jnp.cos(x)
    # tan(x) = sin(x) / cos(x); divide via EUP approximate reciprocal + one
    # Newton step (error ~eps^2, comfortably inside the 1e-4 tolerance).
    r = pl.reciprocal(c, approx=True)
    r = r * (2.0 - c * r)
    t = s * r
    o_ref[...] = jnp.sin(t).astype(o_ref.dtype)


def level0_1_forward(x):
    """Elementwise sin(tan(x)) for an arbitrary-shaped float input, one Pallas call."""
    orig_shape = x.shape
    orig_dtype = x.dtype

    xf = x.reshape(-1)
    n = xf.shape[0]

    # Sublane packing multiple depends on dtype width (8 for f32, 16 for bf16, ...).
    itemsize = jnp.dtype(orig_dtype).itemsize
    sub = 8 * max(1, 4 // itemsize)

    # Lane-dense layout: (rows, 128), rows a multiple of the sublane pack.
    rows = pl.cdiv(n, _LANES)
    rows = pl.cdiv(rows, sub) * sub

    if rows <= _MIN_SINGLE_STEP_ROWS:
        # Tiny input: one grid step; splitting would just add step overhead.
        block_rows = rows
    else:
        # Large input: at least 2 grid steps (v7x 2-TC sharding of the
        # "parallel" axis), blocks capped at _MAX_BLOCK_ROWS.
        target_steps = max(2, pl.cdiv(rows, _MAX_BLOCK_ROWS))
        block_rows = pl.cdiv(pl.cdiv(rows, target_steps), sub) * sub

    rows = pl.cdiv(rows, block_rows) * block_rows
    n_pad = rows * _LANES

    # Skip the pad entirely when already aligned (common NN case): saves a full
    # HBM round trip of the tensor.
    if n_pad == n:
        x2d = xf.reshape(rows, _LANES)
    else:
        x2d = jnp.pad(xf, (0, n_pad - n)).reshape(rows, _LANES)

    out2d = pl.pallas_call(
        _tan_sin_kernel,
        out_shape=jax.ShapeDtypeStruct((rows, _LANES), orig_dtype),
        grid=(rows // block_rows,),
        in_specs=[pl.BlockSpec((block_rows, _LANES), lambda i: (i, 0))],
        out_specs=pl.BlockSpec((block_rows, _LANES), lambda i: (i, 0)),
        input_output_aliases={0: 0},
        compiler_params=pltpu.CompilerParams(
            dimension_semantics=("parallel",)),
    )(x2d)

    if n_pad == n:
        return out2d.reshape(orig_shape)
    # Ragged case: single cheap slice/reshape epilogue back to original layout.
    return out2d.reshape(-1)[:n].reshape(orig_shape)


def _reference(x):
    """Pure-JAX reference identical to the PyTorch forward: sin(tan(x))."""
    return jnp.sin(jnp.tan(x))


if __name__ == "__main__":
    key = jax.random.PRNGKey(0)
    # Bounded inputs (|x| < pi/2) keep tan well-conditioned for the tolerance
    # check; the kernel itself handles any float input.
    x = jax.random.uniform(key, (2, 4, 16, 16), dtype=jnp.float32,
                           minval=-1.0, maxval=1.0)

    out = jax.block_until_ready(level0_1_forward(x))
    ref = _reference(x)

    assert out.shape == x.shape, out.shape
    assert out.dtype == x.dtype, out.dtype
    assert jnp.allclose(out, ref, atol=1e-4, rtol=1e-4), (out, ref)
    print("KERNEL_OK")
</pallas_src>

<mosaic_0001>
module attributes {stable_mosaic.version = 11 : i64} {
  func.func @_tan_sin_kernel(%arg0: i32, %arg1: memref<16x128xf32, #tpu.memory_space<vmem>>, %arg2: memref<16x128xf32, #tpu.memory_space<vmem>>) attributes {dimension_semantics = [#tpu.dimension_semantics<parallel>], iteration_bounds = array<i64: 1>, scalar_prefetch = 0 : i64, scratch_operands = 0 : i64, tpu.core_type = #tpu.core_type<tc>, window_params = [{transform_indices = @transform_0, window_bounds = array<i64: 16, 128>}, {transform_indices = @transform_1, window_bounds = array<i64: 16, 128>}]} {
    %c0 = arith.constant 0 : index
    %c0_0 = arith.constant 0 : index
    %0 = vector.load %arg1[%c0, %c0_0] : memref<16x128xf32, #tpu.memory_space<vmem>>, vector<16x128xf32>
    %1 = math.sin %0 : vector<16x128xf32>
    %2 = math.cos %0 : vector<16x128xf32>
    %3 = tpu.reciprocal %2 {approx = true} : vector<16x128xf32> -> vector<16x128xf32>
    %4 = arith.mulf %2, %3 : vector<16x128xf32>
    %cst = arith.constant 2.000000e+00 : f32
    %5 = vector.broadcast %cst : f32 to vector<16x128xf32>
    %6 = arith.subf %5, %4 : vector<16x128xf32>
    %7 = arith.mulf %3, %6 : vector<16x128xf32>
    %8 = arith.mulf %1, %7 : vector<16x128xf32>
    %9 = math.sin %8 : vector<16x128xf32>
    %c0_1 = arith.constant 0 : index
    %c0_2 = arith.constant 0 : index
    %10 = vector.load %arg2[%c0_1, %c0_2] : memref<16x128xf32, #tpu.memory_space<vmem>>, vector<16x128xf32>
    tpu.vector_store %arg2[%c0_1, %c0_2], %9 {strides = array<i32>} : memref<16x128xf32, #tpu.memory_space<vmem>>, vector<16x128xf32>,
    return
  }
  func.func @transform_0(%arg0: i32) -> (i32, i32) {
    %c0_i32 = arith.constant 0 : i32
    %c0_i32_0 = arith.constant 0 : i32
    return %arg0, %c0_i32 : i32, i32
  }
  func.func @transform_1(%arg0: i32) -> (i32, i32) {
    %c0_i32 = arith.constant 0 : i32
    %c0_i32_0 = arith.constant 0 : i32
    return %arg0, %c0_i32 : i32, i32
  }
}

</mosaic_0001>

<llo_original>
// kernel: tpu_custom_call.1
$region0: #{tpu_custom_call.1}
  #allocation0 [shape = 'u32[]', space=smem, size = 0x4, offset = 0x4, fixed_abs, tag = 'smem constant byte address 0x4 - core index']
  #allocation1 [shape = 'u32[144,128]{1,0:T(1,128)}', space=vmem, size = 0x12000, scoped, tag = 'internal scratch']
  %s0 = inlined_call_operand.hbm [shape: f32[16,128], index: 0, kind: input, shape index: {}, may-alias: {0,1}]
  %s1 = inlined_call_operand.hbm [shape: f32[16,128], index: 1, kind: output, shape index: {}, may-alias: {0,1}]
  %s2 = sld [smem:[#allocation0]]
  $region18: #{tpu_custom_call.1} parent=0
    _
  %s4 = ssub.s32 1, %s2
  %s5 = scalar_select 0, %s4, %s2
  $region1: #{tpu_custom_call.1} parent=0
    #allocation2 [shape = 'u8[8192]{0}', space=vmem, size = 0x2000, scoped, tag = 'input window, operand 0, single buffered']
    #allocation3 [shape = 's32[1]{0}', space=sflag, size = 0x4, scoped, tag = 'scoped memory for tpu_custom_call.1']
    #allocation4 [shape = 's32[1]{0}', space=sflag, size = 0x4, scoped, tag = 'scoped memory for tpu_custom_call.1']
    #allocation5 [shape = 'u8[8192]{0}', space=vmem, size = 0x2000, scoped, tag = 'output window, operand 0, single buffered']
    %6 = vsyncpa [#allocation3], 0
    %7 = vsyncpa [#allocation4], 0
    // Predicated region
    $region2: #{tpu_custom_call.1} parent=1 // pred_check
      _
    $region3: #{tpu_custom_call.1} parent=1 // pred_check_branch
      %9 = sbr.rel (0) target = $region5
    $region4: #{tpu_custom_call.1} parent=1 // pred_region
      %s11 = ssub.s32 256, 256
      %12 = vsyncadd [#allocation3], %s11
      %s13 = sshll.u32 [#allocation2], 4
      %s14 = int_to_ptr.vmem [resolvable:$true] %s13
      %19 = dma.hbm_to_vmem [thread:$0]  %s0, 256, %s14, [#allocation3], 128, 128, 8
    $region5: #{tpu_custom_call.1} parent=1 // pred_fallthru
      _
    // Predicated region
    $region6: #{tpu_custom_call.1} parent=1 // pred_check
      _
    $region7: #{tpu_custom_call.1} parent=1 // pred_check_branch
      %21 = sbr.rel (0) target = $region9
    $region8: #{tpu_custom_call.1} parent=1 // pred_region
      %22 = dma.done [#allocation3], 256
    $region9: #{tpu_custom_call.1} parent=1 // pred_fallthru
      _
    %v23 = vld [vmem:[#allocation2] sm:$0xff]
    %v24 = vld [vmem:[#allocation2 + $0x8] sm:$0xff]
    %v25 = vand.u32 2147483647, %v23
    %vm26 = vcmp.le.f32.partialorder %v25, 0.7853982
    %vm27 = vcmp.lt.s32.totalorder %v23, 0
    %v28 = vand.u32 %v23, 2139095040
    %v29 = vshrl.u32 %v28, 23
    %v30 = vsub.s32 %v29, 127
    %v31 = vand.u32 2147483647, %v23
    %v32 = vand.u32 %v31, 8388607
    %v33 = vor.u32 %v32, 8388608
    %v34 = vsub.s32 0, %v33
    %v35 = vadd.s32 %v30, 1
    %vm36 = vcmp.gt.s32.totalorder %v35, 0
    %v37 = vsel %vm36, %v35, 0
    %v38 = vshrl.u32 %v37, 5
    %v39 = vand.u32 %v37, 31
    %v40 = vsub.s32 32, %v39
    %v41 = vshrl.u32 683565275, %v40
    %v42 = vshll.u32 683565275, %v39
    %v43 = vshrl.u32 2475754826, %v40
    %v44 = vor.u32 %v42, %v43
    %v45 = vshll.u32 2475754826, %v39
    %v46 = vshrl.u32 2131351028, %v40
    %v47 = vor.u32 %v45, %v46
    %v48 = vshll.u32 2131351028, %v39
    %v49 = vshrl.u32 2102212464, %v40
    %v50 = vor.u32 %v48, %v49
    %v51 = vshll.u32 2102212464, %v39
    %v52 = vshrl.u32 920167782, %v40
    %v53 = vor.u32 %v51, %v52
    %v54 = vshll.u32 920167782, %v39
    %v55 = vshrl.u32 1326507024, %v40
    %v56 = vor.u32 %v54, %v55
    %vm57 = vcmp.lt.s32.totalorder %v38, 1
    %vm58 = vcmp.lt.s32.totalorder %v38, 2
    %vm59 = vcmp.lt.s32.totalorder %v38, 3
    %vm60 = vcmp.lt.s32.totalorder %v38, 4
    %v61 = vsel %vm57, %v41, %v44
    %v62 = vsel %vm60, %v50, 2102212464
    %v63 = vsel %vm59, %v47, %v62
    %v64 = vsel %vm58, %v61, %v63
    %v65 = vsel %vm57, %v44, %v47
    %v66 = vsel %vm60, %v53, 920167782
    %v67 = vsel %vm59, %v50, %v66
    %v68 = vsel %vm58, %v65, %v67
    %v69 = vsel %vm57, %v47, %v50
    %v70 = vsel %vm60, %v56, 1326507024
    %v71 = vsel %vm59, %v53, %v70
    %v72 = vsel %vm58, %v69, %v71
    %v73 = vshll.u32 %v33, 8
    %v74 = vmul.u32.u64.compose %v73, %v72
    %v75 = vextract.low.u32 %v74
    %v76 = vextract.high.u32 %v74
    %v77 = vmul.u32.u64.compose %v73, %v68
    %v78 = vextract.low.u32 %v77
    %v79 = vextract.high.u32 %v77
    %v80 = vmul.u32 %v73, %v64
    %v81 = vadd.s32 %v76, %v78
    %vm82 = vc.u32 %v76, %v78
    %v83 = vadd.s32 %v79, 1
    %v84 = vsel %vm82, %v83, %v79
    %v85 = vadd.s32 %v80, %v84
    %v86 = vadd.s32 %v85, 536870912
    %v87 = vshrl.u32 %v86, 30
    %v88 = vshll.u32 %v87, 30
    %v89 = vsub.s32 %v85, %v88
    %vm90 = vcmp.lt.s32.totalorder %v89, 0
    %v91 = vsub.s32 0, %v89
    %v92 = vsel %vm90, %v91, %v89
    %v93 = vclz %v92
    %v94 = vsub.s32 %v93, 2
    %vm95 = vcmp.gt.s32.totalorder 0, %v94
    %v96 = vsel %vm95, 0, %v94
    %v97 = vsub.s32 32, %v96
    %v98 = vshll.u32 %v89, %v96
    %v99 = vshrl.u32 %v81, %v97
    %v100 = vor.u32 %v98, %v99
    %v101 = vsub.s32 4294967266, %v96
    %v102 = vadd.s32 %v101, 127
    %v103 = vshll.u32 %v102, 23
    %v104 = vor.u32 4788187, %v103
    %v105 = vand.u32 2147483647, %v104
    %v107 = vcvt.s32.f32 %v100
    %v108 = vmul.f32 %v107, %v105
    %v109 = vxor.u32 %v108, 2147483648
    %v110 = vsel %vm27, %v109, %v108
    %v111 = vsub.s32 4, %v87
    %v112 = vsel %vm27, %v111, %v87
    %v113 = vsel %vm26, %v23, %v110
    %v114 = vsel %vm26, 0, %v112
    %v115 = vcosq.f32.pop %v113
    %v116 = vsinq.f32.pop %v113
    %vm117 = vweird.f32 %v23
    %v118 = vadd.s32 %v114, 3
    %v119 = vand.u32 %v118, 3
    %vm120 = vcmp.lt.s32.totalorder %v119, 2
    %vm121 = vcmp.eq.s32.totalorder %v119, 0
    %v122 = vxor.u32 %v116, 2147483648
    %v123 = vsel %vm121, %v115, %v122
    %vm124 = vcmp.eq.s32.totalorder %v119, 2
    %v125 = vxor.u32 %v115, 2147483648
    %v126 = vsel %vm124, %v125, %v116
    %v127 = vsel %vm120, %v123, %v126
    %v128 = vsel %vm117, nan, %v127
    %v129 = vand.u32 2147483647, %v24
    %vm130 = vcmp.le.f32.partialorder %v129, 0.7853982
    %vm131 = vcmp.lt.s32.totalorder %v24, 0
    %v132 = vand.u32 %v24, 2139095040
    %v133 = vshrl.u32 %v132, 23
    %v134 = vsub.s32 %v133, 127
    %v135 = vand.u32 2147483647, %v24
    %v136 = vand.u32 %v135, 8388607
    %v137 = vor.u32 %v136, 8388608
    %v138 = vsub.s32 0, %v137
    %v139 = vadd.s32 %v134, 1
    %vm140 = vcmp.gt.s32.totalorder %v139, 0
    %v141 = vsel %vm140, %v139, 0
    %v142 = vshrl.u32 %v141, 5
    %v143 = vand.u32 %v141, 31
    %v144 = vsub.s32 32, %v143
    %v145 = vshrl.u32 683565275, %v144
    %v146 = vshll.u32 683565275, %v143
    %v147 = vshrl.u32 2475754826, %v144
    %v148 = vor.u32 %v146, %v147
    %v149 = vshll.u32 2475754826, %v143
    %v150 = vshrl.u32 2131351028, %v144
    %v151 = vor.u32 %v149, %v150
    %v152 = vshll.u32 2131351028, %v143
    %v153 = vshrl.u32 2102212464, %v144
    %v154 = vor.u32 %v152, %v153
    %v155 = vshll.u32 2102212464, %v143
    %v156 = vshrl.u32 920167782, %v144
    %v157 = vor.u32 %v155, %v156
    %v158 = vshll.u32 920167782, %v143
    %v159 = vshrl.u32 1326507024, %v144
    %v160 = vor.u32 %v158, %v159
    %vm161 = vcmp.lt.s32.totalorder %v142, 1
    %vm162 = vcmp.lt.s32.totalorder %v142, 2
    %vm163 = vcmp.lt.s32.totalorder %v142, 3
    %vm164 = vcmp.lt.s32.totalorder %v142, 4
    %v165 = vsel %vm161, %v145, %v148
    %v166 = vsel %vm164, %v154, 2102212464
    %v167 = vsel %vm163, %v151, %v166
    %v168 = vsel %vm162, %v165, %v167
    %v169 = vsel %vm161, %v148, %v151
    %v170 = vsel %vm164, %v157, 920167782
    %v171 = vsel %vm163, %v154, %v170
    %v172 = vsel %vm162, %v169, %v171
    %v173 = vsel %vm161, %v151, %v154
    %v174 = vsel %vm164, %v160, 1326507024
    %v175 = vsel %vm163, %v157, %v174
    %v176 = vsel %vm162, %v173, %v175
    %v177 = vshll.u32 %v137, 8
    %v178 = vmul.u32.u64.compose %v177, %v176
    %v179 = vextract.low.u32 %v178
    %v180 = vextract.high.u32 %v178
    %v181 = vmul.u32.u64.compose %v177, %v172
    %v182 = vextract.low.u32 %v181
    %v183 = vextract.high.u32 %v181
    %v184 = vmul.u32 %v177, %v168
    %v185 = vadd.s32 %v180, %v182
    %vm186 = vc.u32 %v180, %v182
    %v187 = vadd.s32 %v183, 1
    %v188 = vsel %vm186, %v187, %v183
    %v189 = vadd.s32 %v184, %v188
    %v190 = vadd.s32 %v189, 536870912
    %v191 = vshrl.u32 %v190, 30
    %v192 = vshll.u32 %v191, 30
    %v193 = vsub.s32 %v189, %v192
    %vm194 = vcmp.lt.s32.totalorder %v193, 0
    %v195 = vsub.s32 0, %v193
    %v196 = vsel %vm194, %v195, %v193
    %v197 = vclz %v196
    %v198 = vsub.s32 %v197, 2
    %vm199 = vcmp.gt.s32.totalorder 0, %v198
    %v200 = vsel %vm199, 0, %v198
    %v201 = vsub.s32 32, %v200
    %v202 = vshll.u32 %v193, %v200
    %v203 = vshrl.u32 %v185, %v201
    %v204 = vor.u32 %v202, %v203
    %v205 = vsub.s32 4294967266, %v200
    %v206 = vadd.s32 %v205, 127
    %v207 = vshll.u32 %v206, 23
    %v208 = vor.u32 4788187, %v207
    %v209 = vand.u32 2147483647, %v208
    %v211 = vcvt.s32.f32 %v204
    %v212 = vmul.f32 %v211, %v209
    %v213 = vxor.u32 %v212, 2147483648
    %v214 = vsel %vm131, %v213, %v212
    %v215 = vsub.s32 4, %v191
    %v216 = vsel %vm131, %v215, %v191
    %v217 = vsel %vm130, %v24, %v214
    %v218 = vsel %vm130, 0, %v216
    %v219 = vcosq.f32.pop %v217
    %v220 = vsinq.f32.pop %v217
    %vm221 = vweird.f32 %v24
    %v222 = vadd.s32 %v218, 3
    %v223 = vand.u32 %v222, 3
    %vm224 = vcmp.lt.s32.totalorder %v223, 2
    %vm225 = vcmp.eq.s32.totalorder %v223, 0
    %v226 = vxor.u32 %v220, 2147483648
    %v227 = vsel %vm225, %v219, %v226
    %vm228 = vcmp.eq.s32.totalorder %v223, 2
    %v229 = vxor.u32 %v219, 2147483648
    %v230 = vsel %vm228, %v229, %v220
    %v231 = vsel %vm224, %v227, %v230
    %v232 = vsel %vm221, nan, %v231
    %v233 = vand.u32 2147483647, %v23
    %vm234 = vcmp.le.f32.partialorder %v233, 0.7853982
    %vm235 = vcmp.lt.s32.totalorder %v23, 0
    %v236 = vand.u32 %v23, 2139095040
    %v237 = vshrl.u32 %v236, 23
    %v238 = vsub.s32 %v237, 127
    %v239 = vand.u32 2147483647, %v23
    %v240 = vand.u32 %v239, 8388607
    %v241 = vor.u32 %v240, 8388608
    %v242 = vsub.s32 0, %v241
    %v243 = vadd.s32 %v238, 1
    %vm244 = vcmp.gt.s32.totalorder %v243, 0
    %v245 = vsel %vm244, %v243, 0
    %v246 = vshrl.u32 %v245, 5
    %v247 = vand.u32 %v245, 31
    %v248 = vsub.s32 32, %v247
    %v249 = vshrl.u32 683565275, %v248
    %v250 = vshll.u32 683565275, %v247
    %v251 = vshrl.u32 2475754826, %v248
    %v252 = vor.u32 %v250, %v251
    %v253 = vshll.u32 2475754826, %v247
    %v254 = vshrl.u32 2131351028, %v248
    %v255 = vor.u32 %v253, %v254
    %v256 = vshll.u32 2131351028, %v247
    %v257 = vshrl.u32 2102212464, %v248
    %v258 = vor.u32 %v256, %v257
    %v259 = vshll.u32 2102212464, %v247
    %v260 = vshrl.u32 920167782, %v248
    %v261 = vor.u32 %v259, %v260
    %v262 = vshll.u32 920167782, %v247
    %v263 = vshrl.u32 1326507024, %v248
    %v264 = vor.u32 %v262, %v263
    %vm265 = vcmp.lt.s32.totalorder %v246, 1
    %vm266 = vcmp.lt.s32.totalorder %v246, 2
    %vm267 = vcmp.lt.s32.totalorder %v246, 3
    %vm268 = vcmp.lt.s32.totalorder %v246, 4
    %v269 = vsel %vm265, %v249, %v252
    %v270 = vsel %vm268, %v258, 2102212464
    %v271 = vsel %vm267, %v255, %v270
    %v272 = vsel %vm266, %v269, %v271
    %v273 = vsel %vm265, %v252, %v255
    %v274 = vsel %vm268, %v261, 920167782
    %v275 = vsel %vm267, %v258, %v274
    %v276 = vsel %vm266, %v273, %v275
    %v277 = vsel %vm265, %v255, %v258
    %v278 = vsel %vm268, %v264, 1326507024
    %v279 = vsel %vm267, %v261, %v278
    %v280 = vsel %vm266, %v277, %v279
    %v281 = vshll.u32 %v241, 8
    %v282 = vmul.u32.u64.compose %v281, %v280
    %v283 = vextract.low.u32 %v282
    %v284 = vextract.high.u32 %v282
    %v285 = vmul.u32.u64.compose %v281, %v276
    %v286 = vextract.low.u32 %v285
    %v287 = vextract.high.u32 %v285
    %v288 = vmul.u32 %v281, %v272
    %v289 = vadd.s32 %v284, %v286
    %vm290 = vc.u32 %v284, %v286
    %v291 = vadd.s32 %v287, 1
    %v292 = vsel %vm290, %v291, %v287
    %v293 = vadd.s32 %v288, %v292
    %v294 = vadd.s32 %v293, 536870912
    %v295 = vshrl.u32 %v294, 30
    %v296 = vshll.u32 %v295, 30
    %v297 = vsub.s32 %v293, %v296
    %vm298 = vcmp.lt.s32.totalorder %v297, 0
    %v299 = vsub.s32 0, %v297
    %v300 = vsel %vm298, %v299, %v297
    %v301 = vclz %v300
    %v302 = vsub.s32 %v301, 2
    %vm303 = vcmp.gt.s32.totalorder 0, %v302
    %v304 = vsel %vm303, 0, %v302
    %v305 = vsub.s32 32, %v304
    %v306 = vshll.u32 %v297, %v304
    %v307 = vshrl.u32 %v289, %v305
    %v308 = vor.u32 %v306, %v307
    %v309 = vsub.s32 4294967266, %v304
    %v310 = vadd.s32 %v309, 127
    %v311 = vshll.u32 %v310, 23
    %v312 = vor.u32 4788187, %v311
    %v313 = vand.u32 2147483647, %v312
    %v315 = vcvt.s32.f32 %v308
    %v316 = vmul.f32 %v315, %v313
    %v317 = vxor.u32 %v316, 2147483648
    %v318 = vsel %vm235, %v317, %v316
    %v319 = vsub.s32 4, %v295
    %v320 = vsel %vm235, %v319, %v295
    %v321 = vsel %vm234, %v23, %v318
    %v322 = vsel %vm234, 0, %v320
    %v323 = vcosq.f32.pop %v321
    %v324 = vsinq.f32.pop %v321
    %vm325 = vweird.f32 %v23
    %v326 = vand.u32 %v322, 3
    %vm327 = vcmp.lt.s32.totalorder %v326, 2
    %vm328 = vcmp.eq.s32.totalorder %v326, 0
    %v329 = vxor.u32 %v324, 2147483648
    %v330 = vsel %vm328, %v323, %v329
    %vm331 = vcmp.eq.s32.totalorder %v326, 2
    %v332 = vxor.u32 %v323, 2147483648
    %v333 = vsel %vm331, %v332, %v324
    %v334 = vsel %vm327, %v330, %v333
    %v335 = vsel %vm325, nan, %v334
    %v336 = vand.u32 2147483647, %v24
    %vm337 = vcmp.le.f32.partialorder %v336, 0.7853982
    %vm338 = vcmp.lt.s32.totalorder %v24, 0
    %v339 = vand.u32 %v24, 2139095040
    %v340 = vshrl.u32 %v339, 23
    %v341 = vsub.s32 %v340, 127
    %v342 = vand.u32 2147483647, %v24
    %v343 = vand.u32 %v342, 8388607
    %v344 = vor.u32 %v343, 8388608
    %v345 = vsub.s32 0, %v344
    %v346 = vadd.s32 %v341, 1
    %vm347 = vcmp.gt.s32.totalorder %v346, 0
    %v348 = vsel %vm347, %v346, 0
    %v349 = vshrl.u32 %v348, 5
    %v350 = vand.u32 %v348, 31
    %v351 = vsub.s32 32, %v350
    %v352 = vshrl.u32 683565275, %v351
    %v353 = vshll.u32 683565275, %v350
    %v354 = vshrl.u32 2475754826, %v351
    %v355 = vor.u32 %v353, %v354
    %v356 = vshll.u32 2475754826, %v350
    %v357 = vshrl.u32 2131351028, %v351
    %v358 = vor.u32 %v356, %v357
    %v359 = vshll.u32 2131351028, %v350
    %v360 = vshrl.u32 2102212464, %v351
    %v361 = vor.u32 %v359, %v360
    %v362 = vshll.u32 2102212464, %v350
    %v363 = vshrl.u32 920167782, %v351
    %v364 = vor.u32 %v362, %v363
    %v365 = vshll.u32 920167782, %v350
    %v366 = vshrl.u32 1326507024, %v351
    %v367 = vor.u32 %v365, %v366
    %vm368 = vcmp.lt.s32.totalorder %v349, 1
    %vm369 = vcmp.lt.s32.totalorder %v349, 2
    %vm370 = vcmp.lt.s32.totalorder %v349, 3
    %vm371 = vcmp.lt.s32.totalorder %v349, 4
    %v372 = vsel %vm368, %v352, %v355
    %v373 = vsel %vm371, %v361, 2102212464
    %v374 = vsel %vm370, %v358, %v373
    %v375 = vsel %vm369, %v372, %v374
    %v376 = vsel %vm368, %v355, %v358
    %v377 = vsel %vm371, %v364, 920167782
    %v378 = vsel %vm370, %v361, %v377
    %v379 = vsel %vm369, %v376, %v378
    %v380 = vsel %vm368, %v358, %v361
    %v381 = vsel %vm371, %v367, 1326507024
    %v382 = vsel %vm370, %v364, %v381
    %v383 = vsel %vm369, %v380, %v382
    %v384 = vshll.u32 %v344, 8
    %v385 = vmul.u32.u64.compose %v384, %v383
    %v386 = vextract.low.u32 %v385
    %v387 = vextract.high.u32 %v385
    %v388 = vmul.u32.u64.compose %v384, %v379
    %v389 = vextract.low.u32 %v388
    %v390 = vextract.high.u32 %v388
    %v391 = vmul.u32 %v384, %v375
    %v392 = vadd.s32 %v387, %v389
    %vm393 = vc.u32 %v387, %v389
    %v394 = vadd.s32 %v390, 1
    %v395 = vsel %vm393, %v394, %v390
    %v396 = vadd.s32 %v391, %v395
    %v397 = vadd.s32 %v396, 536870912
    %v398 = vshrl.u32 %v397, 30
    %v399 = vshll.u32 %v398, 30
    %v400 = vsub.s32 %v396, %v399
    %vm401 = vcmp.lt.s32.totalorder %v400, 0
    %v402 = vsub.s32 0, %v400
    %v403 = vsel %vm401, %v402, %v400
    %v404 = vclz %v403
    %v405 = vsub.s32 %v404, 2
    %vm406 = vcmp.gt.s32.totalorder 0, %v405
    %v407 = vsel %vm406, 0, %v405
    %v408 = vsub.s32 32, %v407
    %v409 = vshll.u32 %v400, %v407
    %v410 = vshrl.u32 %v392, %v408
    %v411 = vor.u32 %v409, %v410
    %v412 = vsub.s32 4294967266, %v407
    %v413 = vadd.s32 %v412, 127
    %v414 = vshll.u32 %v413, 23
    %v415 = vor.u32 4788187, %v414
    %v416 = vand.u32 2147483647, %v415
    %v418 = vcvt.s32.f32 %v411
    %v419 = vmul.f32 %v418, %v416
    %v420 = vxor.u32 %v419, 2147483648
    %v421 = vsel %vm338, %v420, %v419
    %v422 = vsub.s32 4, %v398
    %v423 = vsel %vm338, %v422, %v398
    %v424 = vsel %vm337, %v24, %v421
    %v425 = vsel %vm337, 0, %v423
    %v426 = vcosq.f32.pop %v424
    %v427 = vsinq.f32.pop %v424
    %vm428 = vweird.f32 %v24
    %v429 = vand.u32 %v425, 3
    %vm430 = vcmp.lt.s32.totalorder %v429, 2
    %vm431 = vcmp.eq.s32.totalorder %v429, 0
    %v432 = vxor.u32 %v427, 2147483648
    %v433 = vsel %vm431, %v426, %v432
    %vm434 = vcmp.eq.s32.totalorder %v429, 2
    %v435 = vxor.u32 %v426, 2147483648
    %v436 = vsel %vm434, %v435, %v427
    %v437 = vsel %vm430, %v433, %v436
    %v438 = vsel %vm428, nan, %v437
    %v439 = vrcp.pop %v335
    %v440 = vrcp.pop %v438
    %v441 = vmul.f32 %v335, %v439
    %v442 = vmul.f32 %v438, %v440
    %v443 = vsub.f32 2.0, %v441
    %v444 = vsub.f32 2.0, %v442
    %v445 = vmul.f32 %v439, %v443
    %v446 = vmul.f32 %v440, %v444
    %v447 = vmul.f32 %v128, %v445
    %v448 = vmul.f32 %v232, %v446
    %v449 = vand.u32 2147483647, %v447
    %vm450 = vcmp.le.f32.partialorder %v449, 0.7853982
    %vm451 = vcmp.lt.s32.totalorder %v447, 0
    %v452 = vand.u32 %v447, 2139095040
    %v453 = vshrl.u32 %v452, 23
    %v454 = vsub.s32 %v453, 127
    %v455 = vand.u32 2147483647, %v447
    %v456 = vand.u32 %v455, 8388607
    %v457 = vor.u32 %v456, 8388608
    %v458 = vsub.s32 0, %v457
    %v459 = vadd.s32 %v454, 1
    %vm460 = vcmp.gt.s32.totalorder %v459, 0
    %v461 = vsel %vm460, %v459, 0
    %v462 = vshrl.u32 %v461, 5
    %v463 = vand.u32 %v461, 31
    %v464 = vsub.s32 32, %v463
    %v465 = vshrl.u32 683565275, %v464
    %v466 = vshll.u32 683565275, %v463
    %v467 = vshrl.u32 2475754826, %v464
    %v468 = vor.u32 %v466, %v467
    %v469 = vshll.u32 2475754826, %v463
    %v470 = vshrl.u32 2131351028, %v464
    %v471 = vor.u32 %v469, %v470
    %v472 = vshll.u32 2131351028, %v463
    %v473 = vshrl.u32 2102212464, %v464
    %v474 = vor.u32 %v472, %v473
    %v475 = vshll.u32 2102212464, %v463
    %v476 = vshrl.u32 920167782, %v464
    %v477 = vor.u32 %v475, %v476
    %v478 = vshll.u32 920167782, %v463
    %v479 = vshrl.u32 1326507024, %v464
    %v480 = vor.u32 %v478, %v479
    %vm481 = vcmp.lt.s32.totalorder %v462, 1
    %vm482 = vcmp.lt.s32.totalorder %v462, 2
    %vm483 = vcmp.lt.s32.totalorder %v462, 3
    %vm484 = vcmp.lt.s32.totalorder %v462, 4
    %v485 = vsel %vm481, %v465, %v468
    %v486 = vsel %vm484, %v474, 2102212464
    %v487 = vsel %vm483, %v471, %v486
    %v488 = vsel %vm482, %v485, %v487
    %v489 = vsel %vm481, %v468, %v471
    %v490 = vsel %vm484, %v477, 920167782
    %v491 = vsel %vm483, %v474, %v490
    %v492 = vsel %vm482, %v489, %v491
    %v493 = vsel %vm481, %v471, %v474
    %v494 = vsel %vm484, %v480, 1326507024
    %v495 = vsel %vm483, %v477, %v494
    %v496 = vsel %vm482, %v493, %v495
    %v497 = vshll.u32 %v457, 8
    %v498 = vmul.u32.u64.compose %v497, %v496
    %v499 = vextract.low.u32 %v498
    %v500 = vextract.high.u32 %v498
    %v501 = vmul.u32.u64.compose %v497, %v492
    %v502 = vextract.low.u32 %v501
    %v503 = vextract.high.u32 %v501
    %v504 = vmul.u32 %v497, %v488
    %v505 = vadd.s32 %v500, %v502
    %vm506 = vc.u32 %v500, %v502
    %v507 = vadd.s32 %v503, 1
    %v508 = vsel %vm506, %v507, %v503
    %v509 = vadd.s32 %v504, %v508
    %v510 = vadd.s32 %v509, 536870912
    %v511 = vshrl.u32 %v510, 30
    %v512 = vshll.u32 %v511, 30
    %v513 = vsub.s32 %v509, %v512
    %vm514 = vcmp.lt.s32.totalorder %v513, 0
    %v515 = vsub.s32 0, %v513
    %v516 = vsel %vm514, %v515, %v513
    %v517 = vclz %v516
    %v518 = vsub.s32 %v517, 2
    %vm519 = vcmp.gt.s32.totalorder 0, %v518
    %v520 = vsel %vm519, 0, %v518
    %v521 = vsub.s32 32, %v520
    %v522 = vshll.u32 %v513, %v520
    %v523 = vshrl.u32 %v505, %v521
    %v524 = vor.u32 %v522, %v523
    %v525 = vsub.s32 4294967266, %v520
    %v526 = vadd.s32 %v525, 127
    %v527 = vshll.u32 %v526, 23
    %v528 = vor.u32 4788187, %v527
    %v529 = vand.u32 2147483647, %v528
    %v531 = vcvt.s32.f32 %v524
    %v532 = vmul.f32 %v531, %v529
    %v533 = vxor.u32 %v532, 2147483648
    %v534 = vsel %vm451, %v533, %v532
    %v535 = vsub.s32 4, %v511
    %v536 = vsel %vm451, %v535, %v511
    %v537 = vsel %vm450, %v447, %v534
    %v538 = vsel %vm450, 0, %v536
    %v539 = vcosq.f32.pop %v537
    %v540 = vsinq.f32.pop %v537
    %vm541 = vweird.f32 %v447
    %v542 = vadd.s32 %v538, 3
    %v543 = vand.u32 %v542, 3
    %vm544 = vcmp.lt.s32.totalorder %v543, 2
    %vm545 = vcmp.eq.s32.totalorder %v543, 0
    %v546 = vxor.u32 %v540, 2147483648
    %v547 = vsel %vm545, %v539, %v546
    %vm548 = vcmp.eq.s32.totalorder %v543, 2
    %v549 = vxor.u32 %v539, 2147483648
    %v550 = vsel %vm548, %v549, %v540
    %v551 = vsel %vm544, %v547, %v550
    %v552 = vsel %vm541, nan, %v551
    %v553 = vand.u32 2147483647, %v448
    %vm554 = vcmp.le.f32.partialorder %v553, 0.7853982
    %vm555 = vcmp.lt.s32.totalorder %v448, 0
    %v556 = vand.u32 %v448, 2139095040
    %v557 = vshrl.u32 %v556, 23
    %v558 = vsub.s32 %v557, 127
    %v559 = vand.u32 2147483647, %v448
    %v560 = vand.u32 %v559, 8388607
    %v561 = vor.u32 %v560, 8388608
    %v562 = vsub.s32 0, %v561
    %v563 = vadd.s32 %v558, 1
    %vm564 = vcmp.gt.s32.totalorder %v563, 0
    %v565 = vsel %vm564, %v563, 0
    %v566 = vshrl.u32 %v565, 5
    %v567 = vand.u32 %v565, 31
    %v568 = vsub.s32 32, %v567
    %v569 = vshrl.u32 683565275, %v568
    %v570 = vshll.u32 683565275, %v567
    %v571 = vshrl.u32 2475754826, %v568
    %v572 = vor.u32 %v570, %v571
    %v573 = vshll.u32 2475754826, %v567
    %v574 = vshrl.u32 2131351028, %v568
    %v575 = vor.u32 %v573, %v574
    %v576 = vshll.u32 2131351028, %v567
    %v577 = vshrl.u32 2102212464, %v568
    %v578 = vor.u32 %v576, %v577
    %v579 = vshll.u32 2102212464, %v567
    %v580 = vshrl.u32 920167782, %v568
    %v581 = vor.u32 %v579, %v580
    %v582 = vshll.u32 920167782, %v567
    %v583 = vshrl.u32 1326507024, %v568
    %v584 = vor.u32 %v582, %v583
    %vm585 = vcmp.lt.s32.totalorder %v566, 1
    %vm586 = vcmp.lt.s32.totalorder %v566, 2
    %vm587 = vcmp.lt.s32.totalorder %v566, 3
    %vm588 = vcmp.lt.s32.totalorder %v566, 4
    %v589 = vsel %vm585, %v569, %v572
    %v590 = vsel %vm588, %v578, 2102212464
    %v591 = vsel %vm587, %v575, %v590
    %v592 = vsel %vm586, %v589, %v591
    %v593 = vsel %vm585, %v572, %v575
    %v594 = vsel %vm588, %v581, 920167782
    %v595 = vsel %vm587, %v578, %v594
    %v596 = vsel %vm586, %v593, %v595
    %v597 = vsel %vm585, %v575, %v578
    %v598 = vsel %vm588, %v584, 1326507024
    %v599 = vsel %vm587, %v581, %v598
    %v600 = vsel %vm586, %v597, %v599
    %v601 = vshll.u32 %v561, 8
    %v602 = vmul.u32.u64.compose %v601, %v600
    %v603 = vextract.low.u32 %v602
    %v604 = vextract.high.u32 %v602
    %v605 = vmul.u32.u64.compose %v601, %v596
    %v606 = vextract.low.u32 %v605
    %v607 = vextract.high.u32 %v605
    %v608 = vmul.u32 %v601, %v592
    %v609 = vadd.s32 %v604, %v606
    %vm610 = vc.u32 %v604, %v606
    %v611 = vadd.s32 %v607, 1
    %v612 = vsel %vm610, %v611, %v607
    %v613 = vadd.s32 %v608, %v612
    %v614 = vadd.s32 %v613, 536870912
    %v615 = vshrl.u32 %v614, 30
    %v616 = vshll.u32 %v615, 30
    %v617 = vsub.s32 %v613, %v616
    %vm618 = vcmp.lt.s32.totalorder %v617, 0
    %v619 = vsub.s32 0, %v617
    %v620 = vsel %vm618, %v619, %v617
    %v621 = vclz %v620
    %v622 = vsub.s32 %v621, 2
    %vm623 = vcmp.gt.s32.totalorder 0, %v622
    %v624 = vsel %vm623, 0, %v622
    %v625 = vsub.s32 32, %v624
    %v626 = vshll.u32 %v617, %v624
    %v627 = vshrl.u32 %v609, %v625
    %v628 = vor.u32 %v626, %v627
    %v629 = vsub.s32 4294967266, %v624
    %v630 = vadd.s32 %v629, 127
    %v631 = vshll.u32 %v630, 23
    %v632 = vor.u32 4788187, %v631
    %v633 = vand.u32 2147483647, %v632
    %v635 = vcvt.s32.f32 %v628
    %v636 = vmul.f32 %v635, %v633
    %v637 = vxor.u32 %v636, 2147483648
    %v638 = vsel %vm555, %v637, %v636
    %v639 = vsub.s32 4, %v615
    %v640 = vsel %vm555, %v639, %v615
    %v641 = vsel %vm554, %v448, %v638
    %v642 = vsel %vm554, 0, %v640
    %v643 = vcosq.f32.pop %v641
    %v644 = vsinq.f32.pop %v641
    %vm645 = vweird.f32 %v448
    %v646 = vadd.s32 %v642, 3
    %v647 = vand.u32 %v646, 3
    %vm648 = vcmp.lt.s32.totalorder %v647, 2
    %vm649 = vcmp.eq.s32.totalorder %v647, 0
    %v650 = vxor.u32 %v644, 2147483648
    %v651 = vsel %vm649, %v643, %v650
    %vm652 = vcmp.eq.s32.totalorder %v647, 2
    %v653 = vxor.u32 %v643, 2147483648
    %v654 = vsel %vm652, %v653, %v644
    %v655 = vsel %vm648, %v651, %v654
    %v656 = vsel %vm645, nan, %v655
    %657 = vst [vmem:[#allocation5] sm:$0xff] %v552
    %658 = vst [vmem:[#allocation5 + $0x8] sm:$0xff] %v656
    // Predicated region
    $region10: #{tpu_custom_call.1} parent=1 // pred_check
      _
    $region11: #{tpu_custom_call.1} parent=1 // pred_check_branch
      %660 = sbr.rel (0) target = $region13
    $region12: #{tpu_custom_call.1} parent=1 // pred_region
      %s662 = ssub.s32 256, 256
      %663 = vsyncadd [#allocation4], %s662
      %s664 = sshll.u32 [#allocation5], 4
      %s665 = int_to_ptr.vmem [resolvable:$true] %s664
      %670 = dma.vmem_to_hbm [thread:$0]  %s665, 256, %s1, [#allocation4], 128, 128, 8
    $region13: #{tpu_custom_call.1} parent=1 // pred_fallthru
      _
    // Predicated region
    $region14: #{tpu_custom_call.1} parent=1 // pred_check
      _
    $region15: #{tpu_custom_call.1} parent=1 // pred_check_branch
      %672 = sbr.rel (0) target = $region17
    $region16: #{tpu_custom_call.1} parent=1 // pred_region
      %673 = dma.done [#allocation4], 256
    $region17: #{tpu_custom_call.1} parent=1 // pred_fallthru
      _
    %674 = vsyncpa [#allocation3], 1
    %675 = vsyncpa [#allocation4], 1

</llo_original>
